<compile_context>
chip_gen: v7x
topology: tpu7x:2x2x1
jax: 0.10.0
libtpu: 0.0.40
codegen_flags: <defaults>
</compile_context>

<pallas_src>
import functools

import jax
import jax.numpy as jnp
from jax.experimental import pallas as pl
from jax.experimental.pallas import tpu as pltpu

PACK = 16  # batch rows folded into one 128-lane packed row (16 * 8 = 128)


def packed_linear_kernel(x_ref, w_ref, b_ref, o_ref):
    """o = x_packed @ W_blockdiag + b_tiled  (one lane-dense MXU matmul)."""
    o_ref[...] = (
        jnp.dot(x_ref[...], w_ref[...], preferred_element_type=jnp.float32)
        + b_ref[...].astype(jnp.float32)
    ).astype(o_ref.dtype)


def _round_up(a, m):
    return (a + m - 1) // m * m


@functools.partial(jax.jit, static_argnames=("tile_rows",))
def uber_model_forward(x, w, b, *, tile_rows=1024):
    """y = x @ w + b   (x: [B, 8], w: [8, 8] as [in, out], b: [8]) -> [B, 8]."""
    B, f_in = x.shape
    f_out = w.shape[1]
    in_lanes = PACK * f_in      # 128
    out_lanes = PACK * f_out    # 128

    # --- lane-dense repack -------------------------------------------------
    B16 = _round_up(B, PACK)
    if B16 != B:
        # <= 15 rows of pad, only when B is not a multiple of 16.
        x = jnp.pad(x, ((0, B16 - B), (0, 0)))
    R = B16 // PACK
    x_packed = x.reshape(R, in_lanes)                      # free (row-major)
    w_big = jnp.kron(jnp.eye(PACK, dtype=w.dtype), w)      # [128, 128] blockdiag
    b_big = jnp.tile(b.reshape(1, f_out), (1, PACK))       # [1, 128]

    # --- packed-row tiling ---------------------------------------------------
    # lane dim is exactly 128; row dim is a multiple of 8 or the full array,
    # satisfying the (8, 128) BlockSpec rule.
    if R <= 8:
        TILE_R = R                                         # one full block
    else:
        # >= 2 grid steps so v7x's 2nd TensorCore gets work; cap per-step
        # buffers at tile_rows (512 KiB f32 at the default 1024).
        TILE_R = min(tile_rows, max(8, _round_up(pl.cdiv(R, 2), 8)))
    grid = (pl.cdiv(R, TILE_R),)

    itemsize = jnp.dtype(x.dtype).itemsize
    cost = pl.CostEstimate(
        flops=2 * R * in_lanes * out_lanes,
        transcendentals=0,
        bytes_accessed=(R * in_lanes + in_lanes * out_lanes + out_lanes
                        + R * out_lanes) * itemsize,
    )

    y_packed = pl.pallas_call(
        packed_linear_kernel,
        out_shape=jax.ShapeDtypeStruct((R, out_lanes), x.dtype),
        grid=grid,
        in_specs=[
            pl.BlockSpec((TILE_R, in_lanes), lambda i: (i, 0)),     # x: row-tiled
            pl.BlockSpec((in_lanes, out_lanes), lambda i: (0, 0)),  # W: resident
            pl.BlockSpec((1, out_lanes), lambda i: (0, 0)),         # b: resident
        ],
        out_specs=pl.BlockSpec((TILE_R, out_lanes), lambda i: (i, 0)),
        compiler_params=pltpu.CompilerParams(
            # Independent packed-row axis -> shard across v7x's 2 TensorCores;
            # harmless on single-TC v5e/v6e.
            dimension_semantics=("parallel",),
        ),
        cost_estimate=cost,
    )(x_packed, w_big, b_big)

    y = y_packed.reshape(B16, f_out)
    return y[:B] if B16 != B else y


if __name__ == "__main__":
    key = jax.random.PRNGKey(0)
    k_x, k_w, k_b = jax.random.split(key, 3)

    B, F_IN, F_OUT = 2, 8, 8

    # PyTorch stores Linear weight as [out, in]; we keep the transposed
    # [in, out] layout so the kernel computes x @ W + b directly.
    x = jax.random.normal(k_x, (B, F_IN), dtype=jnp.float32)
    w = jax.random.normal(k_w, (F_IN, F_OUT), dtype=jnp.float32) * 0.1
    b = jax.random.normal(k_b, (F_OUT,), dtype=jnp.float32) * 0.1

    y = jax.block_until_ready(uber_model_forward(x, w, b))

    # Cross-check against plain JAX reference.
    y_ref = x @ w + b
    assert y.shape == (B, F_OUT)
    assert jnp.allclose(y, y_ref, atol=1e-5, rtol=1e-5)

    print("KERNEL_OK")
</pallas_src>

<mosaic_0001>
module attributes {stable_mosaic.version = 11 : i64} {
  func.func @packed_linear_kernel(%arg0: i32, %arg1: memref<1x128xf32, #tpu.memory_space<vmem>>, %arg2: memref<128x128xf32, #tpu.memory_space<vmem>>, %arg3: memref<1x128xf32, #tpu.memory_space<vmem>>, %arg4: memref<1x128xf32, #tpu.memory_space<vmem>>) attributes {dimension_semantics = [#tpu.dimension_semantics<parallel>], iteration_bounds = array<i64: 1>, scalar_prefetch = 0 : i64, scratch_operands = 0 : i64, tpu.core_type = #tpu.core_type<tc>, window_params = [{transform_indices = @transform_0, window_bounds = array<i64: 1, 128>}, {pipeline_mode = #tpu.pipeline_mode<synchronous>, transform_indices = @transform_1, window_bounds = array<i64: 128, 128>}, {pipeline_mode = #tpu.pipeline_mode<synchronous>, transform_indices = @transform_2, window_bounds = array<i64: 1, 128>}, {transform_indices = @transform_3, window_bounds = array<i64: 1, 128>}]} {
    %c0 = arith.constant 0 : index
    %c0_0 = arith.constant 0 : index
    %0 = vector.load %arg1[%c0, %c0_0] : memref<1x128xf32, #tpu.memory_space<vmem>>, vector<1x128xf32>
    %c0_1 = arith.constant 0 : index
    %c0_2 = arith.constant 0 : index
    %1 = vector.load %arg2[%c0_1, %c0_2] : memref<128x128xf32, #tpu.memory_space<vmem>>, vector<128x128xf32>
    %cst = arith.constant dense<0.000000e+00> : vector<1x128xf32>
    %2 = tpu.matmul %0, %1, %cst {dimension_numbers = #tpu.dot_dimension_numbers<[1], [0], [0], [1], [0, 0, 1, 1], [], []>} : vector<1x128xf32>, vector<128x128xf32>, vector<1x128xf32> -> vector<1x128xf32>
    %c0_3 = arith.constant 0 : index
    %c0_4 = arith.constant 0 : index
    %3 = vector.load %arg3[%c0_3, %c0_4] : memref<1x128xf32, #tpu.memory_space<vmem>>, vector<1x128xf32>
    %4 = arith.addf %2, %3 : vector<1x128xf32>
    %c0_5 = arith.constant 0 : index
    %c0_6 = arith.constant 0 : index
    %5 = vector.load %arg4[%c0_5, %c0_6] : memref<1x128xf32, #tpu.memory_space<vmem>>, vector<1x128xf32>
    tpu.vector_store %arg4[%c0_5, %c0_6], %4 {strides = array<i32>} : memref<1x128xf32, #tpu.memory_space<vmem>>, vector<1x128xf32>,
    return
  }
  func.func @transform_0(%arg0: i32) -> (i32, i32) {
    %c0_i32 = arith.constant 0 : i32
    %c0_i32_0 = arith.constant 0 : i32
    return %arg0, %c0_i32 : i32, i32
  }
  func.func @transform_1(%arg0: i32) -> (i32, i32) {
    %c0_i32 = arith.constant 0 : i32
    %c0_i32_0 = arith.constant 0 : i32
    %c0_i32_1 = arith.constant 0 : i32
    return %c0_i32, %c0_i32_0 : i32, i32
  }
  func.func @transform_2(%arg0: i32) -> (i32, i32) {
    %c0_i32 = arith.constant 0 : i32
    %c0_i32_0 = arith.constant 0 : i32
    %c0_i32_1 = arith.constant 0 : i32
    return %c0_i32, %c0_i32_0 : i32, i32
  }
  func.func @transform_3(%arg0: i32) -> (i32, i32) {
    %c0_i32 = arith.constant 0 : i32
    %c0_i32_0 = arith.constant 0 : i32
    return %arg0, %c0_i32 : i32, i32
  }
}

</mosaic_0001>

<llo_original>
// kernel: uber_model_forward.1
$region0: #{uber_model_forward.1}
  #allocation0 [shape = 'u32[]', space=smem, size = 0x4, offset = 0x4, fixed_abs, tag = 'smem constant byte address 0x4 - core index']
  #allocation1 [shape = 'u32[144,128]{1,0:T(1,128)}', space=vmem, size = 0x12000, scoped, tag = 'internal scratch']
  %s0 = inlined_call_operand.vmem [shape: f32[1,128], index: 0, kind: input, shape index: {}]
  %s1 = inlined_call_operand.vmem [shape: f32[128,128], index: 1, kind: input, shape index: {}]
  %s2 = inlined_call_operand.vmem [shape: f32[1,128], index: 2, kind: input, shape index: {}]
  %s3 = inlined_call_operand.vmem [shape: f32[1,128], index: 3, kind: output, shape index: {}]
  %s4 = sld [smem:[#allocation0]]
  $region22: #{uber_model_forward.1} parent=0
    _
  %s6 = ssub.s32 1, %s4
  %s7 = scalar_select 0, %s6, %s4
  // Predicated region
  $region2: #{uber_model_forward.1} parent=0 // pred_check
    _
  $region3: #{uber_model_forward.1} parent=0 // pred_check_branch
    %9 = sbr.rel (0) target = $region5
  $region4: #{uber_model_forward.1} parent=0 // pred_region
    _
  $region5: #{uber_model_forward.1} parent=0 // pred_fallthru
    _
  // Predicated region
  $region6: #{uber_model_forward.1} parent=0 // pred_check
    _
  $region7: #{uber_model_forward.1} parent=0 // pred_check_branch
    %11 = sbr.rel (0) target = $region9
  $region8: #{uber_model_forward.1} parent=0 // pred_region
    _
  $region9: #{uber_model_forward.1} parent=0 // pred_fallthru
    _
  // Predicated region
  $region10: #{uber_model_forward.1} parent=0 // pred_check
    _
  $region11: #{uber_model_forward.1} parent=0 // pred_check_branch
    %13 = sbr.rel (0) target = $region13
  $region12: #{uber_model_forward.1} parent=0 // pred_region
    _
  $region13: #{uber_model_forward.1} parent=0 // pred_fallthru
    _
  %v14 = vld [vmem:[%s0] sm:$0x1]
  %v15 = vld [vmem:[%s1] sm:$0xff]
  %v16 = vld [vmem:[%s1 + $0x8] sm:$0xff]
  %v17 = vld [vmem:[%s1 + $0x10] sm:$0xff]
  %v18 = vld [vmem:[%s1 + $0x18] sm:$0xff]
  %v19 = vld [vmem:[%s1 + $0x20] sm:$0xff]
  %v20 = vld [vmem:[%s1 + $0x28] sm:$0xff]
  %v21 = vld [vmem:[%s1 + $0x30] sm:$0xff]
  %v22 = vld [vmem:[%s1 + $0x38] sm:$0xff]
  %v23 = vld [vmem:[%s1 + $0x40] sm:$0xff]
  %v24 = vld [vmem:[%s1 + $0x48] sm:$0xff]
  %v25 = vld [vmem:[%s1 + $0x50] sm:$0xff]
  %v26 = vld [vmem:[%s1 + $0x58] sm:$0xff]
  %v27 = vld [vmem:[%s1 + $0x60] sm:$0xff]
  %v28 = vld [vmem:[%s1 + $0x68] sm:$0xff]
  %v29 = vld [vmem:[%s1 + $0x70] sm:$0xff]
  %v30 = vld [vmem:[%s1 + $0x78] sm:$0xff]
  %v31 = vld [vmem:[%s2] sm:$0x1]
  %32 = vmatprep.subr.mxu0 0.0
  %33 = vmatpush1.msra.mxu0 %v15
  %34 = vmatprep.subr.mxu0 0.0
  %35 = vmatpush1.msra.mxu0 %v16
  %36 = vmatprep.subr.mxu0 0.0
  %37 = vmatpush1.msra.mxu0 %v17
  %38 = vmatprep.subr.mxu0 0.0
  %39 = vmatpush1.msra.mxu0 %v18
  %40 = vmatprep.subr.mxu0 0.0
  %41 = vmatpush1.msra.mxu0 %v19
  %42 = vmatprep.subr.mxu0 0.0
  %43 = vmatpush1.msra.mxu0 %v20
  %44 = vmatprep.subr.mxu0 0.0
  %45 = vmatpush1.msra.mxu0 %v21
  %46 = vmatprep.subr.mxu0 0.0
  %47 = vmatpush1.msra.mxu0 %v22
  %48 = vmatprep.subr.mxu0 0.0
  %49 = vmatpush1.msra.mxu0 %v23
  %50 = vmatprep.subr.mxu0 0.0
  %51 = vmatpush1.msra.mxu0 %v24
  %52 = vmatprep.subr.mxu0 0.0
  %53 = vmatpush1.msra.mxu0 %v25
  %54 = vmatprep.subr.mxu0 0.0
  %55 = vmatpush1.msra.mxu0 %v26
  %56 = vmatprep.subr.mxu0 0.0
  %57 = vmatpush1.msra.mxu0 %v27
  %58 = vmatprep.subr.mxu0 0.0
  %59 = vmatpush1.msra.mxu0 %v28
  %60 = vmatprep.subr.mxu0 0.0
  %61 = vmatpush1.msra.mxu0 %v29
  %62 = vmatprep.subr.mxu0 0.0
  %63 = vmatpush1.msra.mxu0 %v30
  %64 = vmatprep.subr.mxu0 0.0
  %65 = vmatpush1.msra.mxu0 0.0
  %66 = vmatprep.subr.mxu0 0.0
  %67 = vmatpush1.msra.mxu0 0.0
  %68 = vmatprep.subr.mxu0 0.0
  %69 = vmatpush1.msra.mxu0 0.0
  %70 = vmatprep.subr.mxu0 0.0
  %71 = vmatpush1.msra.mxu0 0.0
  %72 = vmatprep.subr.mxu0 0.0
  %73 = vmatpush1.msra.mxu0 0.0
  %74 = vmatprep.subr.mxu0 0.0
  %75 = vmatpush1.msra.mxu0 0.0
  %76 = vmatprep.subr.mxu0 0.0
  %77 = vmatpush1.msra.mxu0 0.0
  %78 = vmatprep.subr.mxu0 0.0
  %79 = vmatpush1.msra.mxu0 0.0
  %80 = vmatprep.subr.mxu0 0.0
  %81 = vmatpush1.msra.mxu0 0.0
  %82 = vmatprep.subr.mxu0 0.0
  %83 = vmatpush1.msra.mxu0 0.0
  %84 = vmatprep.subr.mxu0 0.0
  %85 = vmatpush1.msra.mxu0 0.0
  %86 = vmatprep.subr.mxu0 0.0
  %87 = vmatpush1.msra.mxu0 0.0
  %88 = vmatprep.subr.mxu0 0.0
  %89 = vmatpush1.msra.mxu0 0.0
  %90 = vmatprep.subr.mxu0 0.0
  %91 = vmatpush1.msra.mxu0 0.0
  %92 = vmatprep.subr.mxu0 0.0
  %93 = vmatpush1.msra.mxu0 0.0
  %94 = vmatprep.subr.mxu0 0.0
  %95 = vmatpush1.msra.mxu0 0.0
  %96 = vmatprep.mubr.f32.mxu0 0.0
  %97 = vmatmul.mubr.f32.gmra.mrb[0].mxu0 %v14
  %v98 = vpop.f32.mrb[0].mxu0
  %v99 = vadd.f32 %v31, %v98
  %v100 = vpop.f32.mrb[0].mxu0
  %101 = vdwg.mxu0
  %102 = vst [vmem:[%s3] sm:$0x1] %v99
  // Predicated region
  $region14: #{uber_model_forward.1} parent=0 // pred_check
    _
  $region15: #{uber_model_forward.1} parent=0 // pred_check_branch
    %104 = sbr.rel (0) target = $region17
  $region16: #{uber_model_forward.1} parent=0 // pred_region
    _
  $region17: #{uber_model_forward.1} parent=0 // pred_fallthru
    _
  // Predicated region
  $region18: #{uber_model_forward.1} parent=0 // pred_check
    _
  $region19: #{uber_model_forward.1} parent=0 // pred_check_branch
    %106 = sbr.rel (0) target = $region21
  $region20: #{uber_model_forward.1} parent=0 // pred_region
    _
  $region21: #{uber_model_forward.1} parent=0 // pred_fallthru
    _

</llo_original>
